<compile_context>
chip_gen: v6e
topology: v6e:2x2x1
jax: 0.10.0
libtpu: 0.0.40
codegen_flags: <defaults>
</compile_context>

<pallas_src>
import functools

import jax
import jax.numpy as jnp
from jax.experimental import pallas as pl
from jax.experimental.pallas import tpu as pltpu

EPS = 1e-5


# ---------------------------------------------------------------------------
# Kernels
# ---------------------------------------------------------------------------

def _bn_column_kernel(x_ref, w_ref, b_ref, o_ref):
    """Whole batch column-resident in VMEM: exact two-pass statistics at a
    single HBM read, one FMA per element for the normalize."""
    xf = x_ref[...].astype(jnp.float32)          # upcast before any squaring
    inv_n = jnp.float32(1.0 / xf.shape[0])

    mean = jnp.sum(xf, axis=0, keepdims=True) * inv_n          # (1, TC)
    centered = xf - mean
    var = jnp.sum(centered * centered, axis=0, keepdims=True) * inv_n
    inv_std = jax.lax.rsqrt(var + EPS)

    scale = inv_std * w_ref[...].astype(jnp.float32)           # (1, TC)
    shift = b_ref[...].astype(jnp.float32)
    o_ref[...] = (centered * scale + shift).astype(o_ref.dtype)


def _bn_stats_kernel(x_ref, w_ref, b_ref, scale_ref, shift_ref,
                     sum_ref, sumsq_ref, *, n_total, tn):
    """Large-N pass 1: accumulate per-channel sum / sumsq over N tiles,
    finalize to per-channel (scale, shift). Grid = (c_blocks, n_blocks)."""
    i = pl.program_id(1)

    @pl.when(i == 0)
    def _():
        sum_ref[...] = jnp.zeros_like(sum_ref)
        sumsq_ref[...] = jnp.zeros_like(sumsq_ref)

    xf = x_ref[...].astype(jnp.float32)
    if n_total % tn != 0:
        # Edge block over N: zero out the garbage rows so sums stay exact.
        rows = jax.lax.broadcasted_iota(jnp.int32, (tn, 1), 0) + i * tn
        xf = jnp.where(rows < n_total, xf, 0.0)

    sum_ref[...] += jnp.sum(xf, axis=0, keepdims=True)
    sumsq_ref[...] += jnp.sum(xf * xf, axis=0, keepdims=True)

    @pl.when(i == pl.num_programs(1) - 1)
    def _():
        inv_n = jnp.float32(1.0 / n_total)
        mean = sum_ref[...] * inv_n
        # One-pass variance here (x is only read once in this pass); clamp
        # guards against cancellation producing a tiny negative value.
        var = jnp.maximum(sumsq_ref[...] * inv_n - mean * mean, 0.0)
        inv_std = jax.lax.rsqrt(var + EPS)
        scale = inv_std * w_ref[...].astype(jnp.float32)
        scale_ref[...] = scale
        shift_ref[...] = b_ref[...].astype(jnp.float32) - mean * scale


def _bn_normalize_kernel(scale_ref, shift_ref, x_ref, o_ref):
    """Large-N pass 2: y = x * scale + shift (per-channel broadcast)."""
    xf = x_ref[...].astype(jnp.float32)
    o_ref[...] = (xf * scale_ref[...] + shift_ref[...]).astype(o_ref.dtype)


# ---------------------------------------------------------------------------
# Tiling / budget helpers
# ---------------------------------------------------------------------------

def _vmem_budgets():
    """(I/O budget for tile sizing, vmem_limit_bytes) — generation aware."""
    try:
        info = pltpu.get_tpu_info()
        cap = int(getattr(info, "vmem_capacity_bytes", 64 * 1024 * 1024))
    except Exception:
        cap = 64 * 1024 * 1024            # conservative (v7x per-TC VMEM)
    io_budget = int(cap * 0.6)            # double-buffered tiles + f32 temps
    vmem_limit = int(cap * 0.8)           # headroom for Mosaic scratch
    return io_budget, vmem_limit


def _pick_channel_tile(n, c, itemsize, io_budget):
    """Lane tile (multiple of 128) for the column-resident path."""
    c128 = pl.cdiv(c, 128) * 128
    # per lane-column: in + out double-buffered + f32 working copies
    per_lane = n * (4 * itemsize + 8)
    max_fit = max(128, (io_budget // per_lane) // 128 * 128)
    tc = min(c128, max_fit)
    # Prefer >= 4 channel blocks (dual-TC sharding on v7x, pipeline overlap)
    # as long as each step still moves >= ~1 MiB of HBM traffic.
    quarter = (c128 // 4) // 128 * 128
    if quarter >= 128 and 2 * n * quarter * itemsize >= (1 << 20):
        tc = min(tc, quarter)
    return tc


def _pick_2d_tile(n, c, itemsize, io_budget):
    """(tn, tc) tile for the large-N two-kernel path."""
    c128 = pl.cdiv(c, 128) * 128
    per_elem = 4 * itemsize + 8
    tc = min(c128, 512)
    while tc > 128 and 8 * tc * per_elem > io_budget:
        tc -= 128
    tn = io_budget // (tc * per_elem)
    tn = max(8, min(pl.cdiv(n, 8) * 8, (tn // 8) * 8))
    return tn, tc


# ---------------------------------------------------------------------------
# Wrapper
# ---------------------------------------------------------------------------

def sp_batch_norm(x, weight, bias, *, _force_io_budget=None):
    """Forward of SpBatchNorm for 2-D input x of shape (N, C)."""
    N, C = x.shape
    if N <= 1:                              # module: `if len(x) <= 1: return x`
        return x

    itemsize = jnp.dtype(x.dtype).itemsize

    # Tiny inputs: pallas_call launch/DMA-priming overhead dominates; a fused
    # XLA elementwise expression wins outright.
    if _force_io_budget is None and N * C * itemsize <= 128 * 1024:
        xf = x.astype(jnp.float32)
        mean = jnp.mean(xf, axis=0, keepdims=True)
        var = jnp.mean(jnp.square(xf - mean), axis=0, keepdims=True)
        y = ((xf - mean) * jax.lax.rsqrt(var + EPS)
             * weight.astype(jnp.float32) + bias.astype(jnp.float32))
        return y.astype(x.dtype)

    io_budget, vmem_limit = _vmem_budgets()
    if _force_io_budget is not None:
        io_budget = _force_io_budget

    w2 = weight.reshape(1, C)
    b2 = bias.reshape(1, C)

    per_lane = N * (4 * itemsize + 8)
    if 128 * per_lane <= io_budget:
        # ------------------------------------------------------------------
        # Common path: whole batch fits per channel tile. Single read/write.
        # ------------------------------------------------------------------
        tc = _pick_channel_tile(N, C, itemsize, io_budget)
        return pl.pallas_call(
            _bn_column_kernel,
            out_shape=jax.ShapeDtypeStruct((N, C), x.dtype),
            grid_spec=pltpu.PrefetchScalarGridSpec(
                num_scalar_prefetch=0,
                grid=(pl.cdiv(C, tc),),
                in_specs=[
                    pl.BlockSpec((N, tc), lambda j: (0, j)),
                    pl.BlockSpec((1, tc), lambda j: (0, j)),
                    pl.BlockSpec((1, tc), lambda j: (0, j)),
                ],
                out_specs=pl.BlockSpec((N, tc), lambda j: (0, j)),
            ),
            compiler_params=pltpu.CompilerParams(
                dimension_semantics=("parallel",),
                vmem_limit_bytes=vmem_limit,
            ),
        )(x, w2, b2)

    # ----------------------------------------------------------------------
    # Large-N path: N-tiled reduction (stats kernel) + normalize kernel.
    # Costs one extra read of x but keeps tiles at roofline-friendly sizes.
    # ----------------------------------------------------------------------
    tn, tc = _pick_2d_tile(N, C, itemsize, io_budget)
    c_blocks = pl.cdiv(C, tc)
    n_blocks = pl.cdiv(N, tn)

    scale, shift = pl.pallas_call(
        functools.partial(_bn_stats_kernel, n_total=N, tn=tn),
        out_shape=(jax.ShapeDtypeStruct((1, C), jnp.float32),
                   jax.ShapeDtypeStruct((1, C), jnp.float32)),
        grid_spec=pltpu.PrefetchScalarGridSpec(
            num_scalar_prefetch=0,
            grid=(c_blocks, n_blocks),
            in_specs=[
                pl.BlockSpec((tn, tc), lambda j, i: (i, j)),
                pl.BlockSpec((1, tc), lambda j, i: (0, j)),
                pl.BlockSpec((1, tc), lambda j, i: (0, j)),
            ],
            out_specs=(pl.BlockSpec((1, tc), lambda j, i: (0, j)),
                       pl.BlockSpec((1, tc), lambda j, i: (0, j))),
            scratch_shapes=[pltpu.VMEM((1, tc), jnp.float32),
                            pltpu.VMEM((1, tc), jnp.float32)],
        ),
        compiler_params=pltpu.CompilerParams(
            dimension_semantics=("parallel", "arbitrary"),
            vmem_limit_bytes=vmem_limit,
        ),
    )(x, w2, b2)

    return pl.pallas_call(
        _bn_normalize_kernel,
        out_shape=jax.ShapeDtypeStruct((N, C), x.dtype),
        grid_spec=pltpu.PrefetchScalarGridSpec(
            num_scalar_prefetch=0,
            grid=(c_blocks, n_blocks),
            in_specs=[
                pl.BlockSpec((1, tc), lambda j, i: (0, j)),
                pl.BlockSpec((1, tc), lambda j, i: (0, j)),
                pl.BlockSpec((tn, tc), lambda j, i: (i, j)),
            ],
            out_specs=pl.BlockSpec((tn, tc), lambda j, i: (i, j)),
        ),
        compiler_params=pltpu.CompilerParams(
            dimension_semantics=("parallel", "parallel"),
            vmem_limit_bytes=vmem_limit,
        ),
    )(scale, shift, x)


# ---------------------------------------------------------------------------
# Demo / self-check
# ---------------------------------------------------------------------------

if __name__ == "__main__":
    key = jax.random.PRNGKey(0)
    k1, k2, k3 = jax.random.split(key, 3)

    def ref_bn(x, w, b):
        if x.shape[0] <= 1:
            return x
        m = jnp.mean(x, axis=0, keepdims=True)
        v = jnp.mean((x - m) ** 2, axis=0, keepdims=True)
        return (x - m) / jnp.sqrt(v + EPS) * w + b

    # Main case: goes through the Pallas column kernel; C is NOT a multiple
    # of 128 so the clamped edge-block path (no host pad/slice) is exercised.
    N, C = 64, 600
    x = jax.random.normal(k1, (N, C), dtype=jnp.float32)
    weight = jax.random.normal(k2, (C,), dtype=jnp.float32) * 0.1 + 1.0
    bias = jax.random.normal(k3, (C,), dtype=jnp.float32) * 0.1
    out = jax.block_until_ready(sp_batch_norm(x, weight, bias))
    assert jnp.allclose(out, ref_bn(x, weight, bias), atol=1e-4, rtol=1e-4), \
        "column-kernel mismatch vs reference"

    # Tiny-shape fast path (the module's default-size demo case).
    xs = jax.random.normal(k1, (8, 32), dtype=jnp.float32)
    ws = jnp.ones((32,), jnp.float32)
    bs = jnp.zeros((32,), jnp.float32)
    outs = jax.block_until_ready(sp_batch_norm(xs, ws, bs))
    assert jnp.allclose(outs, ref_bn(xs, ws, bs), atol=1e-4, rtol=1e-4), \
        "fast-path mismatch vs reference"

    # N == 1: module returns x unchanged.
    assert jnp.array_equal(sp_batch_norm(xs[:1], ws, bs), xs[:1])

    # Large-N two-kernel path (forced via a small I/O budget for testing;
    # also exercises the masked N edge block since 1024 % tn != 0).
    xb = jax.random.normal(k2, (1024, 256), dtype=jnp.float32)
    wb = jax.random.normal(k3, (256,), jnp.float32) * 0.1 + 1.0
    bb = jax.random.normal(k1, (256,), jnp.float32) * 0.1
    outb = jax.block_until_ready(
        sp_batch_norm(xb, wb, bb, _force_io_budget=256 * 1024))
    assert jnp.allclose(outb, ref_bn(xb, wb, bb), atol=1e-4, rtol=1e-4), \
        "large-N path mismatch vs reference"

    print("KERNEL_OK")
</pallas_src>

<mosaic_0001>
module attributes {stable_mosaic.version = 11 : i64} {
  func.func @_bn_column_kernel(%arg0: i32, %arg1: memref<64x640xf32, #tpu.memory_space<vmem>>, %arg2: memref<1x640xf32, #tpu.memory_space<vmem>>, %arg3: memref<1x640xf32, #tpu.memory_space<vmem>>, %arg4: memref<64x640xf32, #tpu.memory_space<vmem>>) attributes {dimension_semantics = [#tpu.dimension_semantics<parallel>], iteration_bounds = array<i64: 1>, scalar_prefetch = 0 : i64, scratch_operands = 0 : i64, tpu.core_type = #tpu.core_type<tc>, window_params = [{transform_indices = @transform_0, window_bounds = array<i64: 64, 640>}, {transform_indices = @transform_1, window_bounds = array<i64: 1, 640>}, {transform_indices = @transform_2, window_bounds = array<i64: 1, 640>}, {transform_indices = @transform_3, window_bounds = array<i64: 64, 640>}]} {
    %c0 = arith.constant 0 : index
    %c0_0 = arith.constant 0 : index
    %0 = vector.load %arg1[%c0, %c0_0] : memref<64x640xf32, #tpu.memory_space<vmem>>, vector<64x640xf32>
    %cst = arith.constant dense<0.000000e+00> : vector<640xf32>
    %1 = vector.multi_reduction <add>, %0, %cst [0] : vector<64x640xf32> to vector<640xf32>
    %2 = vector.shape_cast %1 : vector<640xf32> to vector<1x640xf32>
    %cst_1 = arith.constant 1.562500e-02 : f32
    %3 = vector.broadcast %cst_1 : f32 to vector<1x640xf32>
    %4 = arith.mulf %2, %3 : vector<1x640xf32>
    %5 = vector.broadcast %4 : vector<1x640xf32> to vector<64x640xf32>
    %6 = arith.subf %0, %5 : vector<64x640xf32>
    %7 = arith.mulf %6, %6 : vector<64x640xf32>
    %cst_2 = arith.constant dense<0.000000e+00> : vector<640xf32>
    %8 = vector.multi_reduction <add>, %7, %cst_2 [0] : vector<64x640xf32> to vector<640xf32>
    %9 = vector.shape_cast %8 : vector<640xf32> to vector<1x640xf32>
    %cst_3 = arith.constant 1.562500e-02 : f32
    %10 = vector.broadcast %cst_3 : f32 to vector<1x640xf32>
    %11 = arith.mulf %9, %10 : vector<1x640xf32>
    %cst_4 = arith.constant 9.99999974E-6 : f32
    %12 = vector.broadcast %cst_4 : f32 to vector<1x640xf32>
    %13 = arith.addf %11, %12 : vector<1x640xf32>
    %14 = math.rsqrt %13 : vector<1x640xf32>
    %c0_5 = arith.constant 0 : index
    %c0_6 = arith.constant 0 : index
    %15 = vector.load %arg2[%c0_5, %c0_6] : memref<1x640xf32, #tpu.memory_space<vmem>>, vector<1x640xf32>
    %16 = arith.mulf %14, %15 : vector<1x640xf32>
    %c0_7 = arith.constant 0 : index
    %c0_8 = arith.constant 0 : index
    %17 = vector.load %arg3[%c0_7, %c0_8] : memref<1x640xf32, #tpu.memory_space<vmem>>, vector<1x640xf32>
    %18 = vector.broadcast %16 : vector<1x640xf32> to vector<64x640xf32>
    %19 = arith.mulf %6, %18 : vector<64x640xf32>
    %20 = vector.broadcast %17 : vector<1x640xf32> to vector<64x640xf32>
    %21 = arith.addf %19, %20 : vector<64x640xf32>
    %c0_9 = arith.constant 0 : index
    %c0_10 = arith.constant 0 : index
    %22 = vector.load %arg4[%c0_9, %c0_10] : memref<64x640xf32, #tpu.memory_space<vmem>>, vector<64x640xf32>
    tpu.vector_store %arg4[%c0_9, %c0_10], %21 {strides = array<i32>} : memref<64x640xf32, #tpu.memory_space<vmem>>, vector<64x640xf32>,
    return
  }
  func.func @transform_0(%arg0: i32) -> (i32, i32) {
    %c0_i32 = arith.constant 0 : i32
    %c0_i32_0 = arith.constant 0 : i32
    return %c0_i32, %arg0 : i32, i32
  }
  func.func @transform_1(%arg0: i32) -> (i32, i32) {
    %c0_i32 = arith.constant 0 : i32
    %c0_i32_0 = arith.constant 0 : i32
    return %c0_i32, %arg0 : i32, i32
  }
  func.func @transform_2(%arg0: i32) -> (i32, i32) {
    %c0_i32 = arith.constant 0 : i32
    %c0_i32_0 = arith.constant 0 : i32
    return %c0_i32, %arg0 : i32, i32
  }
  func.func @transform_3(%arg0: i32) -> (i32, i32) {
    %c0_i32 = arith.constant 0 : i32
    %c0_i32_0 = arith.constant 0 : i32
    return %c0_i32, %arg0 : i32, i32
  }
}

</mosaic_0001>

<llo_original>
// kernel: tpu_custom_call.1
$region0: #{tpu_custom_call.1}
  #allocation0 [shape = 'u32[]', space=smem, size = 0x4, offset = 0x4, fixed_abs, tag = 'smem constant byte address 0x4 - core index']
  #allocation1 [shape = 'u32[144,128]{1,0:T(1,128)}', space=vmem, size = 0x12000, scoped, tag = 'internal scratch']
  %s0 = inlined_call_operand.hbm [shape: f32[64,600], index: 0, kind: input, shape index: {}]
  %s1 = inlined_call_operand.hbm [shape: f32[1,600], index: 1, kind: input, shape index: {}]
  %s2 = inlined_call_operand.hbm [shape: f32[1,600], index: 2, kind: input, shape index: {}]
  %s3 = inlined_call_operand.hbm [shape: f32[64,600], index: 3, kind: output, shape index: {}]
  %s4 = sld [smem:[#allocation0]]
  $region34: #{tpu_custom_call.1} parent=0
    _
  %s6 = ssub.s32 1, %s4
  %s7 = scalar_select 0, %s6, %s4
  $region1: #{tpu_custom_call.1} parent=0
    #allocation2 [shape = 'u8[163840]{0}', space=vmem, size = 0x28000, scoped, tag = 'input window, operand 0, single buffered']
    #allocation3 [shape = 's32[1]{0}', space=sflag, size = 0x4, scoped, tag = 'scoped memory for tpu_custom_call.1']
    #allocation4 [shape = 's32[1]{0}', space=sflag, size = 0x4, scoped, tag = 'scoped memory for tpu_custom_call.1']
    #allocation5 [shape = 'u8[2560]{0}', space=vmem, size = 0xc00, scoped, tag = 'input window, operand 1, single buffered']
    #allocation6 [shape = 's32[1]{0}', space=sflag, size = 0x4, scoped, tag = 'scoped memory for tpu_custom_call.1']
    #allocation7 [shape = 'u8[2560]{0}', space=vmem, size = 0xc00, scoped, tag = 'input window, operand 2, single buffered']
    #allocation8 [shape = 'u8[163840]{0}', space=vmem, size = 0x28000, scoped, tag = 'output window, operand 0, single buffered']
    %8 = vsyncpa [#allocation3], 0
    %9 = vsyncpa [#allocation6], 0
    %10 = vsyncpa [#allocation4], 0
    // Predicated region
    $region2: #{tpu_custom_call.1} parent=1 // pred_check
      _
    $region3: #{tpu_custom_call.1} parent=1 // pred_check_branch
      %12 = sbr.rel (0) target = $region5
    $region4: #{tpu_custom_call.1} parent=1 // pred_region
      %s14 = ssub.s32 5120, 5120
      %15 = vsyncadd [#allocation3], %s14
      %s16 = sshll.u32 [#allocation2], 4
      %s17 = int_to_ptr.vmem [resolvable:$true] %s16
      %22 = dma.hbm_to_vmem [thread:$0]  %s0, 5120, %s17, [#allocation3], 640, 640, 40
    $region5: #{tpu_custom_call.1} parent=1 // pred_fallthru
      _
    // Predicated region
    $region6: #{tpu_custom_call.1} parent=1 // pred_check
      _
    $region7: #{tpu_custom_call.1} parent=1 // pred_check_branch
      %24 = sbr.rel (0) target = $region9
    $region8: #{tpu_custom_call.1} parent=1 // pred_region
      %s26 = ssub.s32 80, 80
      %27 = vsyncadd [#allocation6], %s26
      %s29 = sshll.u32 [#allocation5], 4
      %s30 = int_to_ptr.vmem [resolvable:$true] %s29
      %32 = dma.hbm_to_vmem [thread:$0]  %s1, 80, %s30, [#allocation6]
    $region9: #{tpu_custom_call.1} parent=1 // pred_fallthru
      _
    // Predicated region
    $region10: #{tpu_custom_call.1} parent=1 // pred_check
      _
    $region11: #{tpu_custom_call.1} parent=1 // pred_check_branch
      %34 = sbr.rel (0) target = $region13
    $region12: #{tpu_custom_call.1} parent=1 // pred_region
      %s36 = ssub.s32 80, 80
      %37 = vsyncadd [#allocation6], %s36
      %s39 = sshll.u32 [#allocation7], 4
      %s40 = int_to_ptr.vmem [resolvable:$true] %s39
      %42 = dma.hbm_to_vmem [thread:$0]  %s2, 80, %s40, [#allocation6]
    $region13: #{tpu_custom_call.1} parent=1 // pred_fallthru
      _
    // Predicated region
    $region14: #{tpu_custom_call.1} parent=1 // pred_check
      _
    $region15: #{tpu_custom_call.1} parent=1 // pred_check_branch
      %44 = sbr.rel (0) target = $region17
    $region16: #{tpu_custom_call.1} parent=1 // pred_region
      %45 = dma.done [#allocation3], 5120
    $region17: #{tpu_custom_call.1} parent=1 // pred_fallthru
      _
    // Predicated region
    $region18: #{tpu_custom_call.1} parent=1 // pred_check
      _
    $region19: #{tpu_custom_call.1} parent=1 // pred_check_branch
      %47 = sbr.rel (0) target = $region21
    $region20: #{tpu_custom_call.1} parent=1 // pred_region
      %48 = dma.done [#allocation6], 80
    $region21: #{tpu_custom_call.1} parent=1 // pred_fallthru
      _
    // Predicated region
    $region22: #{tpu_custom_call.1} parent=1 // pred_check
      _
    $region23: #{tpu_custom_call.1} parent=1 // pred_check_branch
      %50 = sbr.rel (0) target = $region25
    $region24: #{tpu_custom_call.1} parent=1 // pred_region
      %51 = dma.done [#allocation6], 80
    $region25: #{tpu_custom_call.1} parent=1 // pred_fallthru
      _
    %v52 = vld [vmem:[#allocation2] sm:$0xff]
    %v53 = vld [vmem:[#allocation2 + $0x8] sm:$0xff]
    %v54 = vld [vmem:[#allocation2 + $0x10] sm:$0xff]
    %v55 = vld [vmem:[#allocation2 + $0x18] sm:$0xff]
    %v56 = vld [vmem:[#allocation2 + $0x20] sm:$0xff]
    %v57 = vld [vmem:[#allocation2 + $0x28] sm:$0xff]
    %v58 = vld [vmem:[#allocation2 + $0x30] sm:$0xff]
    %v59 = vld [vmem:[#allocation2 + $0x38] sm:$0xff]
    %v60 = vld [vmem:[#allocation2 + $0x40] sm:$0xff]
    %v61 = vld [vmem:[#allocation2 + $0x48] sm:$0xff]
    %v62 = vld [vmem:[#allocation2 + $0x50] sm:$0xff]
    %v63 = vld [vmem:[#allocation2 + $0x58] sm:$0xff]
    %v64 = vld [vmem:[#allocation2 + $0x60] sm:$0xff]
    %v65 = vld [vmem:[#allocation2 + $0x68] sm:$0xff]
    %v66 = vld [vmem:[#allocation2 + $0x70] sm:$0xff]
    %v67 = vld [vmem:[#allocation2 + $0x78] sm:$0xff]
    %v68 = vld [vmem:[#allocation2 + $0x80] sm:$0xff]
    %v69 = vld [vmem:[#allocation2 + $0x88] sm:$0xff]
    %v70 = vld [vmem:[#allocation2 + $0x90] sm:$0xff]
    %v71 = vld [vmem:[#allocation2 + $0x98] sm:$0xff]
    %v72 = vld [vmem:[#allocation2 + $0xa0] sm:$0xff]
    %v73 = vld [vmem:[#allocation2 + $0xa8] sm:$0xff]
    %v74 = vld [vmem:[#allocation2 + $0xb0] sm:$0xff]
    %v75 = vld [vmem:[#allocation2 + $0xb8] sm:$0xff]
    %v76 = vld [vmem:[#allocation2 + $0xc0] sm:$0xff]
    %v77 = vld [vmem:[#allocation2 + $0xc8] sm:$0xff]
    %v78 = vld [vmem:[#allocation2 + $0xd0] sm:$0xff]
    %v79 = vld [vmem:[#allocation2 + $0xd8] sm:$0xff]
    %v80 = vld [vmem:[#allocation2 + $0xe0] sm:$0xff]
    %v81 = vld [vmem:[#allocation2 + $0xe8] sm:$0xff]
    %v82 = vld [vmem:[#allocation2 + $0xf0] sm:$0xff]
    %v83 = vld [vmem:[#allocation2 + $0xf8] sm:$0xff]
    %v84 = vld [vmem:[#allocation2 + $0x100] sm:$0xff]
    %v85 = vld [vmem:[#allocation2 + $0x108] sm:$0xff]
    %v86 = vld [vmem:[#allocation2 + $0x110] sm:$0xff]
    %v87 = vld [vmem:[#allocation2 + $0x118] sm:$0xff]
    %v88 = vld [vmem:[#allocation2 + $0x120] sm:$0xff]
    %v89 = vld [vmem:[#allocation2 + $0x128] sm:$0xff]
    %v90 = vld [vmem:[#allocation2 + $0x130] sm:$0xff]
    %v91 = vld [vmem:[#allocation2 + $0x138] sm:$0xff]
    %v92 = vadd.f32 %v52, %v57
    %v93 = vadd.f32 %v92, %v62
    %v94 = vadd.f32 %v93, %v67
    %v95 = vadd.f32 %v94, %v72
    %v96 = vadd.f32 %v95, %v77
    %v97 = vadd.f32 %v96, %v82
    %v98 = vadd.f32 %v97, %v87
    %v99 = vrot.slane %v98, 4
    %v100 = vadd.f32 %v98, %v99
    %v101 = vrot.slane %v100, 2
    %v102 = vadd.f32 %v100, %v101
    %v103 = vrot.slane %v102, 1
    %v104 = vadd.f32 %v102, %v103
    %v105 = vadd.f32 %v53, %v58
    %v106 = vadd.f32 %v105, %v63
    %v107 = vadd.f32 %v106, %v68
    %v108 = vadd.f32 %v107, %v73
    %v109 = vadd.f32 %v108, %v78
    %v110 = vadd.f32 %v109, %v83
    %v111 = vadd.f32 %v110, %v88
    %v112 = vrot.slane %v111, 4
    %v113 = vadd.f32 %v111, %v112
    %v114 = vrot.slane %v113, 2
    %v115 = vadd.f32 %v113, %v114
    %v116 = vrot.slane %v115, 1
    %v117 = vadd.f32 %v115, %v116
    %v118 = vadd.f32 %v54, %v59
    %v119 = vadd.f32 %v118, %v64
    %v120 = vadd.f32 %v119, %v69
    %v121 = vadd.f32 %v120, %v74
    %v122 = vadd.f32 %v121, %v79
    %v123 = vadd.f32 %v122, %v84
    %v124 = vadd.f32 %v123, %v89
    %v125 = vrot.slane %v124, 4
    %v126 = vadd.f32 %v124, %v125
    %v127 = vrot.slane %v126, 2
    %v128 = vadd.f32 %v126, %v127
    %v129 = vrot.slane %v128, 1
    %v130 = vadd.f32 %v128, %v129
    %v131 = vadd.f32 %v55, %v60
    %v132 = vadd.f32 %v131, %v65
    %v133 = vadd.f32 %v132, %v70
    %v134 = vadd.f32 %v133, %v75
    %v135 = vadd.f32 %v134, %v80
    %v136 = vadd.f32 %v135, %v85
    %v137 = vadd.f32 %v136, %v90
    %v138 = vrot.slane %v137, 4
    %v139 = vadd.f32 %v137, %v138
    %v140 = vrot.slane %v139, 2
    %v141 = vadd.f32 %v139, %v140
    %v142 = vrot.slane %v141, 1
    %v143 = vadd.f32 %v141, %v142
    %v144 = vadd.f32 %v56, %v61
    %v145 = vadd.f32 %v144, %v66
    %v146 = vadd.f32 %v145, %v71
    %v147 = vadd.f32 %v146, %v76
    %v148 = vadd.f32 %v147, %v81
    %v149 = vadd.f32 %v148, %v86
    %v150 = vadd.f32 %v149, %v91
    %v151 = vrot.slane %v150, 4
    %v152 = vadd.f32 %v150, %v151
    %v153 = vrot.slane %v152, 2
    %v154 = vadd.f32 %v152, %v153
    %v155 = vrot.slane %v154, 1
    %v156 = vadd.f32 %v154, %v155
    %v157 = vmul.f32 %v104, 0.015625
    %v158 = vmul.f32 %v117, 0.015625
    %v159 = vmul.f32 %v130, 0.015625
    %v160 = vmul.f32 %v143, 0.015625
    %v161 = vmul.f32 %v156, 0.015625
    %v162 = vsub.f32 %v52, %v157
    %v163 = vsub.f32 %v53, %v158
    %v164 = vsub.f32 %v54, %v159
    %v165 = vsub.f32 %v55, %v160
    %v166 = vsub.f32 %v56, %v161
    %v167 = vsub.f32 %v57, %v157
    %v168 = vsub.f32 %v58, %v158
    %v169 = vsub.f32 %v59, %v159
    %v170 = vsub.f32 %v60, %v160
    %v171 = vsub.f32 %v61, %v161
    %v172 = vsub.f32 %v62, %v157
    %v173 = vsub.f32 %v63, %v158
    %v174 = vsub.f32 %v64, %v159
    %v175 = vsub.f32 %v65, %v160
    %v176 = vsub.f32 %v66, %v161
    %v177 = vsub.f32 %v67, %v157
    %v178 = vsub.f32 %v68, %v158
    %v179 = vsub.f32 %v69, %v159
    %v180 = vsub.f32 %v70, %v160
    %v181 = vsub.f32 %v71, %v161
    %v182 = vsub.f32 %v72, %v157
    %v183 = vsub.f32 %v73, %v158
    %v184 = vsub.f32 %v74, %v159
    %v185 = vsub.f32 %v75, %v160
    %v186 = vsub.f32 %v76, %v161
    %v187 = vsub.f32 %v77, %v157
    %v188 = vsub.f32 %v78, %v158
    %v189 = vsub.f32 %v79, %v159
    %v190 = vsub.f32 %v80, %v160
    %v191 = vsub.f32 %v81, %v161
    %v192 = vsub.f32 %v82, %v157
    %v193 = vsub.f32 %v83, %v158
    %v194 = vsub.f32 %v84, %v159
    %v195 = vsub.f32 %v85, %v160
    %v196 = vsub.f32 %v86, %v161
    %v197 = vsub.f32 %v87, %v157
    %v198 = vsub.f32 %v88, %v158
    %v199 = vsub.f32 %v89, %v159
    %v200 = vsub.f32 %v90, %v160
    %v201 = vsub.f32 %v91, %v161
    %v202 = vmul.f32 %v162, %v162
    %v203 = vmul.f32 %v163, %v163
    %v204 = vmul.f32 %v164, %v164
    %v205 = vmul.f32 %v165, %v165
    %v206 = vmul.f32 %v166, %v166
    %v207 = vmul.f32 %v167, %v167
    %v208 = vmul.f32 %v168, %v168
    %v209 = vmul.f32 %v169, %v169
    %v210 = vmul.f32 %v170, %v170
    %v211 = vmul.f32 %v171, %v171
    %v212 = vmul.f32 %v172, %v172
    %v213 = vmul.f32 %v173, %v173
    %v214 = vmul.f32 %v174, %v174
    %v215 = vmul.f32 %v175, %v175
    %v216 = vmul.f32 %v176, %v176
    %v217 = vmul.f32 %v177, %v177
    %v218 = vmul.f32 %v178, %v178
    %v219 = vmul.f32 %v179, %v179
    %v220 = vmul.f32 %v180, %v180
    %v221 = vmul.f32 %v181, %v181
    %v222 = vmul.f32 %v182, %v182
    %v223 = vmul.f32 %v183, %v183
    %v224 = vmul.f32 %v184, %v184
    %v225 = vmul.f32 %v185, %v185
    %v226 = vmul.f32 %v186, %v186
    %v227 = vmul.f32 %v187, %v187
    %v228 = vmul.f32 %v188, %v188
    %v229 = vmul.f32 %v189, %v189
    %v230 = vmul.f32 %v190, %v190
    %v231 = vmul.f32 %v191, %v191
    %v232 = vmul.f32 %v192, %v192
    %v233 = vmul.f32 %v193, %v193
    %v234 = vmul.f32 %v194, %v194
    %v235 = vmul.f32 %v195, %v195
    %v236 = vmul.f32 %v196, %v196
    %v237 = vmul.f32 %v197, %v197
    %v238 = vmul.f32 %v198, %v198
    %v239 = vmul.f32 %v199, %v199
    %v240 = vmul.f32 %v200, %v200
    %v241 = vmul.f32 %v201, %v201
    %v242 = vadd.f32 %v202, %v207
    %v243 = vadd.f32 %v242, %v212
    %v244 = vadd.f32 %v243, %v217
    %v245 = vadd.f32 %v244, %v222
    %v246 = vadd.f32 %v245, %v227
    %v247 = vadd.f32 %v246, %v232
    %v248 = vadd.f32 %v247, %v237
    %v249 = vrot.slane %v248, 4
    %v250 = vadd.f32 %v248, %v249
    %v251 = vrot.slane %v250, 2
    %v252 = vadd.f32 %v250, %v251
    %v253 = vrot.slane %v252, 1
    %v254 = vadd.f32 %v252, %v253
    %v255 = vadd.f32 %v203, %v208
    %v256 = vadd.f32 %v255, %v213
    %v257 = vadd.f32 %v256, %v218
    %v258 = vadd.f32 %v257, %v223
    %v259 = vadd.f32 %v258, %v228
    %v260 = vadd.f32 %v259, %v233
    %v261 = vadd.f32 %v260, %v238
    %v262 = vrot.slane %v261, 4
    %v263 = vadd.f32 %v261, %v262
    %v264 = vrot.slane %v263, 2
    %v265 = vadd.f32 %v263, %v264
    %v266 = vrot.slane %v265, 1
    %v267 = vadd.f32 %v265, %v266
    %v268 = vadd.f32 %v204, %v209
    %v269 = vadd.f32 %v268, %v214
    %v270 = vadd.f32 %v269, %v219
    %v271 = vadd.f32 %v270, %v224
    %v272 = vadd.f32 %v271, %v229
    %v273 = vadd.f32 %v272, %v234
    %v274 = vadd.f32 %v273, %v239
    %v275 = vrot.slane %v274, 4
    %v276 = vadd.f32 %v274, %v275
    %v277 = vrot.slane %v276, 2
    %v278 = vadd.f32 %v276, %v277
    %v279 = vrot.slane %v278, 1
    %v280 = vadd.f32 %v278, %v279
    %v281 = vadd.f32 %v205, %v210
    %v282 = vadd.f32 %v281, %v215
    %v283 = vadd.f32 %v282, %v220
    %v284 = vadd.f32 %v283, %v225
    %v285 = vadd.f32 %v284, %v230
    %v286 = vadd.f32 %v285, %v235
    %v287 = vadd.f32 %v286, %v240
    %v288 = vrot.slane %v287, 4
    %v289 = vadd.f32 %v287, %v288
    %v290 = vrot.slane %v289, 2
    %v291 = vadd.f32 %v289, %v290
    %v292 = vrot.slane %v291, 1
    %v293 = vadd.f32 %v291, %v292
    %v294 = vadd.f32 %v206, %v211
    %v295 = vadd.f32 %v294, %v216
    %v296 = vadd.f32 %v295, %v221
    %v297 = vadd.f32 %v296, %v226
    %v298 = vadd.f32 %v297, %v231
    %v299 = vadd.f32 %v298, %v236
    %v300 = vadd.f32 %v299, %v241
    %v301 = vrot.slane %v300, 4
    %v302 = vadd.f32 %v300, %v301
    %v303 = vrot.slane %v302, 2
    %v304 = vadd.f32 %v302, %v303
    %v305 = vrot.slane %v304, 1
    %v306 = vadd.f32 %v304, %v305
    %v307 = vmul.f32 %v254, 0.015625
    %v308 = vmul.f32 %v267, 0.015625
    %v309 = vmul.f32 %v280, 0.015625
    %v310 = vmul.f32 %v293, 0.015625
    %v311 = vmul.f32 %v306, 0.015625
    %v312 = vadd.f32 %v307, 1e-05
    %v313 = vadd.f32 %v308, 1e-05
    %v314 = vadd.f32 %v309, 1e-05
    %v315 = vadd.f32 %v310, 1e-05
    %v316 = vadd.f32 %v311, 1e-05
    %v317 = vrsqrt.pop %v312
    %v318 = vrsqrt.pop %v313
    %v319 = vrsqrt.pop %v314
    %v320 = vrsqrt.pop %v315
    %v321 = vrsqrt.pop %v316
    %v322 = vld [vmem:[#allocation5] sm:$0x1f]
    %v324 = vlaneseq
    %v325 = vshrl.u32 %v324, 7
    %v326 = vsub.s32 0, %v325
    %v327 = vrot.slane %v322, %v326
    %v328 = vlaneseq
    %v329 = vshrl.u32 %v328, 7
    %v330 = vsub.s32 1, %v329
    %v331 = vrot.slane %v322, %v330
    %v332 = vlaneseq
    %v333 = vshrl.u32 %v332, 7
    %v334 = vsub.s32 2, %v333
    %v335 = vrot.slane %v322, %v334
    %v336 = vlaneseq
    %v337 = vshrl.u32 %v336, 7
    %v338 = vsub.s32 3, %v337
    %v339 = vrot.slane %v322, %v338
    %v340 = vlaneseq
    %v341 = vshrl.u32 %v340, 7
    %v342 = vsub.s32 4, %v341
    %v343 = vrot.slane %v322, %v342
    %v349 = vmul.f32 %v317, %v327
    %v350 = vmul.f32 %v318, %v331
    %v351 = vmul.f32 %v319, %v335
    %v352 = vmul.f32 %v320, %v339
    %v353 = vmul.f32 %v321, %v343
    %v354 = vld [vmem:[#allocation7] sm:$0x1f]
    %v355 = vlaneseq
    %v356 = vshrl.u32 %v355, 7
    %v357 = vsub.s32 0, %v356
    %v358 = vrot.slane %v349, %v357
    %v359 = vlaneseq
    %v360 = vshrl.u32 %v359, 7
    %v361 = vsub.s32 0, %v360
    %v362 = vrot.slane %v350, %v361
    %v363 = vlaneseq
    %v364 = vshrl.u32 %v363, 7
    %v365 = vsub.s32 0, %v364
    %v366 = vrot.slane %v351, %v365
    %v367 = vlaneseq
    %v368 = vshrl.u32 %v367, 7
    %v369 = vsub.s32 0, %v368
    %v370 = vrot.slane %v352, %v369
    %v371 = vlaneseq
    %v372 = vshrl.u32 %v371, 7
    %v373 = vsub.s32 0, %v372
    %v374 = vrot.slane %v353, %v373
    %v375 = vmul.f32 %v162, %v358
    %v376 = vmul.f32 %v163, %v362
    %v377 = vmul.f32 %v164, %v366
    %v378 = vmul.f32 %v165, %v370
    %v379 = vmul.f32 %v166, %v374
    %v380 = vmul.f32 %v167, %v358
    %v381 = vmul.f32 %v168, %v362
    %v382 = vmul.f32 %v169, %v366
    %v383 = vmul.f32 %v170, %v370
    %v384 = vmul.f32 %v171, %v374
    %v385 = vmul.f32 %v172, %v358
    %v386 = vmul.f32 %v173, %v362
    %v387 = vmul.f32 %v174, %v366
    %v388 = vmul.f32 %v175, %v370
    %v389 = vmul.f32 %v176, %v374
    %v390 = vmul.f32 %v177, %v358
    %v391 = vmul.f32 %v178, %v362
    %v392 = vmul.f32 %v179, %v366
    %v393 = vmul.f32 %v180, %v370
    %v394 = vmul.f32 %v181, %v374
    %v395 = vmul.f32 %v182, %v358
    %v396 = vmul.f32 %v183, %v362
    %v397 = vmul.f32 %v184, %v366
    %v398 = vmul.f32 %v185, %v370
    %v399 = vmul.f32 %v186, %v374
    %v400 = vmul.f32 %v187, %v358
    %v401 = vmul.f32 %v188, %v362
    %v402 = vmul.f32 %v189, %v366
    %v403 = vmul.f32 %v190, %v370
    %v404 = vmul.f32 %v191, %v374
    %v405 = vmul.f32 %v192, %v358
    %v406 = vmul.f32 %v193, %v362
    %v407 = vmul.f32 %v194, %v366
    %v408 = vmul.f32 %v195, %v370
    %v409 = vmul.f32 %v196, %v374
    %v410 = vmul.f32 %v197, %v358
    %v411 = vmul.f32 %v198, %v362
    %v412 = vmul.f32 %v199, %v366
    %v413 = vmul.f32 %v200, %v370
    %v414 = vmul.f32 %v201, %v374
    %v416 = vlaneseq
    %v417 = vshrl.u32 %v416, 7
    %v418 = vsub.s32 0, %v417
    %v419 = vrot.slane %v354, %v418
    %v420 = vlaneseq
    %v421 = vshrl.u32 %v420, 7
    %v422 = vsub.s32 1, %v421
    %v423 = vrot.slane %v354, %v422
    %v424 = vlaneseq
    %v425 = vshrl.u32 %v424, 7
    %v426 = vsub.s32 2, %v425
    %v427 = vrot.slane %v354, %v426
    %v428 = vlaneseq
    %v429 = vshrl.u32 %v428, 7
    %v430 = vsub.s32 3, %v429
    %v431 = vrot.slane %v354, %v430
    %v432 = vlaneseq
    %v433 = vshrl.u32 %v432, 7
    %v434 = vsub.s32 4, %v433
    %v435 = vrot.slane %v354, %v434
    %v441 = vadd.f32 %v375, %v419
    %v442 = vadd.f32 %v376, %v423
    %v443 = vadd.f32 %v377, %v427
    %v444 = vadd.f32 %v378, %v431
    %v445 = vadd.f32 %v379, %v435
    %v446 = vadd.f32 %v380, %v419
    %v447 = vadd.f32 %v381, %v423
    %v448 = vadd.f32 %v382, %v427
    %v449 = vadd.f32 %v383, %v431
    %v450 = vadd.f32 %v384, %v435
    %v451 = vadd.f32 %v385, %v419
    %v452 = vadd.f32 %v386, %v423
    %v453 = vadd.f32 %v387, %v427
    %v454 = vadd.f32 %v388, %v431
    %v455 = vadd.f32 %v389, %v435
    %v456 = vadd.f32 %v390, %v419
    %v457 = vadd.f32 %v391, %v423
    %v458 = vadd.f32 %v392, %v427
    %v459 = vadd.f32 %v393, %v431
    %v460 = vadd.f32 %v394, %v435
    %v461 = vadd.f32 %v395, %v419
    %v462 = vadd.f32 %v396, %v423
    %v463 = vadd.f32 %v397, %v427
    %v464 = vadd.f32 %v398, %v431
    %v465 = vadd.f32 %v399, %v435
    %v466 = vadd.f32 %v400, %v419
    %v467 = vadd.f32 %v401, %v423
    %v468 = vadd.f32 %v402, %v427
    %v469 = vadd.f32 %v403, %v431
    %v470 = vadd.f32 %v404, %v435
    %v471 = vadd.f32 %v405, %v419
    %v472 = vadd.f32 %v406, %v423
    %v473 = vadd.f32 %v407, %v427
    %v474 = vadd.f32 %v408, %v431
    %v475 = vadd.f32 %v409, %v435
    %v476 = vadd.f32 %v410, %v419
    %v477 = vadd.f32 %v411, %v423
    %v478 = vadd.f32 %v412, %v427
    %v479 = vadd.f32 %v413, %v431
    %v480 = vadd.f32 %v414, %v435
    %481 = vst [vmem:[#allocation8] sm:$0xff] %v441
    %482 = vst [vmem:[#allocation8 + $0x8] sm:$0xff] %v442
    %483 = vst [vmem:[#allocation8 + $0x10] sm:$0xff] %v443
    %484 = vst [vmem:[#allocation8 + $0x18] sm:$0xff] %v444
    %485 = vst [vmem:[#allocation8 + $0x20] sm:$0xff] %v445
    %486 = vst [vmem:[#allocation8 + $0x28] sm:$0xff] %v446
    %487 = vst [vmem:[#allocation8 + $0x30] sm:$0xff] %v447
    %488 = vst [vmem:[#allocation8 + $0x38] sm:$0xff] %v448
    %489 = vst [vmem:[#allocation8 + $0x40] sm:$0xff] %v449
    %490 = vst [vmem:[#allocation8 + $0x48] sm:$0xff] %v450
    %491 = vst [vmem:[#allocation8 + $0x50] sm:$0xff] %v451
    %492 = vst [vmem:[#allocation8 + $0x58] sm:$0xff] %v452
    %493 = vst [vmem:[#allocation8 + $0x60] sm:$0xff] %v453
    %494 = vst [vmem:[#allocation8 + $0x68] sm:$0xff] %v454
    %495 = vst [vmem:[#allocation8 + $0x70] sm:$0xff] %v455
    %496 = vst [vmem:[#allocation8 + $0x78] sm:$0xff] %v456
    %497 = vst [vmem:[#allocation8 + $0x80] sm:$0xff] %v457
    %498 = vst [vmem:[#allocation8 + $0x88] sm:$0xff] %v458
    %499 = vst [vmem:[#allocation8 + $0x90] sm:$0xff] %v459
    %500 = vst [vmem:[#allocation8 + $0x98] sm:$0xff] %v460
    %501 = vst [vmem:[#allocation8 + $0xa0] sm:$0xff] %v461
    %502 = vst [vmem:[#allocation8 + $0xa8] sm:$0xff] %v462
    %503 = vst [vmem:[#allocation8 + $0xb0] sm:$0xff] %v463
    %504 = vst [vmem:[#allocation8 + $0xb8] sm:$0xff] %v464
    %505 = vst [vmem:[#allocation8 + $0xc0] sm:$0xff] %v465
    %506 = vst [vmem:[#allocation8 + $0xc8] sm:$0xff] %v466
    %507 = vst [vmem:[#allocation8 + $0xd0] sm:$0xff] %v467
    %508 = vst [vmem:[#allocation8 + $0xd8] sm:$0xff] %v468
    %509 = vst [vmem:[#allocation8 + $0xe0] sm:$0xff] %v469
    %510 = vst [vmem:[#allocation8 + $0xe8] sm:$0xff] %v470
    %511 = vst [vmem:[#allocation8 + $0xf0] sm:$0xff] %v471
    %512 = vst [vmem:[#allocation8 + $0xf8] sm:$0xff] %v472
    %513 = vst [vmem:[#allocation8 + $0x100] sm:$0xff] %v473
    %514 = vst [vmem:[#allocation8 + $0x108] sm:$0xff] %v474
    %515 = vst [vmem:[#allocation8 + $0x110] sm:$0xff] %v475
    %516 = vst [vmem:[#allocation8 + $0x118] sm:$0xff] %v476
    %517 = vst [vmem:[#allocation8 + $0x120] sm:$0xff] %v477
    %518 = vst [vmem:[#allocation8 + $0x128] sm:$0xff] %v478
    %519 = vst [vmem:[#allocation8 + $0x130] sm:$0xff] %v479
    %520 = vst [vmem:[#allocation8 + $0x138] sm:$0xff] %v480
    // Predicated region
    $region26: #{tpu_custom_call.1} parent=1 // pred_check
      _
    $region27: #{tpu_custom_call.1} parent=1 // pred_check_branch
      %522 = sbr.rel (0) target = $region29
    $region28: #{tpu_custom_call.1} parent=1 // pred_region
      %s524 = ssub.s32 5120, 5120
      %525 = vsyncadd [#allocation4], %s524
      %s526 = sshll.u32 [#allocation8], 4
      %s527 = int_to_ptr.vmem [resolvable:$true] %s526
      %532 = dma.vmem_to_hbm [thread:$0]  %s527, 5120, %s3, [#allocation4], 640, 640, 40
    $region29: #{tpu_custom_call.1} parent=1 // pred_fallthru
      _
    // Predicated region
    $region30: #{tpu_custom_call.1} parent=1 // pred_check
      _
    $region31: #{tpu_custom_call.1} parent=1 // pred_check_branch
      %534 = sbr.rel (0) target = $region33
    $region32: #{tpu_custom_call.1} parent=1 // pred_region
      %535 = dma.done [#allocation4], 5120
    $region33: #{tpu_custom_call.1} parent=1 // pred_fallthru
      _
    %536 = vsyncpa [#allocation3], 1
    %537 = vsyncpa [#allocation6], 1
    %538 = vsyncpa [#allocation4], 1

</llo_original>
